<compile_context>
chip_gen: v7x
topology: tpu7x:2x2x1
jax: 0.10.0
libtpu: 0.0.40
codegen_flags: <defaults>
</compile_context>

<pallas_src>
import jax
import jax.numpy as jnp
from jax.experimental import pallas as pl
from jax.experimental.pallas import tpu as pltpu


def _resblock_linear_shortcut_kernel(x_ref, wc1_ref, bc1_ref, w2_ref, b2_ref, o_ref):
    """Shortcut is a Linear layer; its weight is fused into wc1 = [W1 | Ws]."""
    n_out = o_ref.shape[-1]
    x = x_ref[...]

    # One MXU matmul over K = n_in producing a lane-dense [TB, 2*n_out] slab
    # (f32 accumulation), covering both linear1 and the shortcut.
    z = jnp.dot(x, wc1_ref[...], preferred_element_type=jnp.float32) + bc1_ref[...]

    h = jnp.tanh(z[:, :n_out])      # main branch: tanh(linear1(x))
    identity = z[:, n_out:]         # shortcut branch: shortcut(x)

    out = jnp.dot(h.astype(w2_ref.dtype), w2_ref[...],
                  preferred_element_type=jnp.float32) + b2_ref[...]
    o_ref[...] = jnp.tanh(out + identity).astype(o_ref.dtype)


def _resblock_identity_shortcut_kernel(x_ref, w1_ref, b1_ref, w2_ref, b2_ref, o_ref):
    """Shortcut is Identity (n_in == n_out): residual comes straight from x."""
    x = x_ref[...]

    z = jnp.dot(x, w1_ref[...], preferred_element_type=jnp.float32) + b1_ref[...]
    h = jnp.tanh(z)

    out = jnp.dot(h.astype(w2_ref.dtype), w2_ref[...],
                  preferred_element_type=jnp.float32) + b2_ref[...]
    o_ref[...] = jnp.tanh(out + x.astype(jnp.float32)).astype(o_ref.dtype)


def tanh_resblock(x, w1, b1, w2, b2, ws=None, bs=None, *,
                  block_b=512, compute_dtype=None):
    """TanhResBlock forward.

    x : [B, n_in]
    w1: [n_in, n_out],  b1: [n_out]        (linear1; weights stored as [in, out] for x @ W)
    w2: [n_out, n_out], b2: [n_out]        (linear2)
    ws: [n_in, n_out] or None, bs: [n_out] or None
        (shortcut Linear; None => Identity shortcut, requires n_in == n_out)
    block_b: batch rows per grid step when B is large.
    compute_dtype: e.g. jnp.bfloat16 to feed the MXU bf16 inputs (f32 accumulate).
    """
    B, n_in = x.shape
    n_out = w1.shape[1]
    out_dtype = x.dtype

    identity_shortcut = ws is None
    if identity_shortcut:
        assert n_in == n_out, "Identity shortcut requires n_input == n_output"

    b2_2d = b2.reshape(1, n_out).astype(jnp.float32)

    if identity_shortcut:
        wa = w1
        ba = b1.reshape(1, n_out).astype(jnp.float32)
        kernel = _resblock_identity_shortcut_kernel
        wa_width = n_out
    else:
        # Fuse linear1 + shortcut weights along the output axis (shared LHS x).
        wa = jnp.concatenate([w1, ws], axis=1)                      # [n_in, 2*n_out]
        ba = jnp.concatenate([b1, bs]).reshape(1, 2 * n_out).astype(jnp.float32)
        kernel = _resblock_linear_shortcut_kernel
        wa_width = 2 * n_out

    if compute_dtype is not None:
        # bf16 LHS/RHS with f32 accumulation (v6e/v7x MXU throughput on large B);
        # biases and all element-wise math stay f32.
        x = x.astype(compute_dtype)
        wa = wa.astype(compute_dtype)
        w2 = w2.astype(compute_dtype)

    # Batch tiling: full array when small, else block_b rows per grid step.
    # (8,128) rule: feature dims are kept full-width, so only the sublane
    # (second-to-last) dim of the x/out blocks must be a multiple of 8 (or the
    # full B when B <= block_b).
    if B <= block_b:
        tb = B
    else:
        tb = max(8, (block_b // 8) * 8)
    grid = (pl.cdiv(B, tb),)

    const2d = lambda shape: pl.BlockSpec(shape, lambda i: (0, 0))

    return pl.pallas_call(
        kernel,
        out_shape=jax.ShapeDtypeStruct((B, n_out), out_dtype),
        grid=grid,
        in_specs=[
            pl.BlockSpec((tb, n_in), lambda i: (i, 0)),    # x (batch-tiled)
            const2d((n_in, wa_width)),                     # W1 or [W1 | Ws] (VMEM-resident)
            const2d((1, wa_width)),                        # b1 or [b1 | bs]
            const2d((n_out, n_out)),                       # W2
            const2d((1, n_out)),                           # b2
        ],
        out_specs=pl.BlockSpec((tb, n_out), lambda i: (i, 0)),
        compiler_params=pltpu.CompilerParams(
            dimension_semantics=("parallel",),     # v7x: shard batch grid over 2 TCs
            vmem_limit_bytes=32 * 1024 * 1024,     # safe on v5e/v6e/v7x for these tiles
        ),
    )(x, wa, ba, w2, b2_2d)


def _init_linear(key, fan_in, fan_out):
    """PyTorch-style default init: U(-1/sqrt(fan_in), 1/sqrt(fan_in))."""
    kw, kb = jax.random.split(key)
    bound = 1.0 / jnp.sqrt(jnp.float32(fan_in))
    # stored as [in, out] (transpose of torch's [out, in]) for x @ W
    w = jax.random.uniform(kw, (fan_in, fan_out), jnp.float32, -bound, bound)
    b = jax.random.uniform(kb, (fan_out,), jnp.float32, -bound, bound)
    return w, b


def _reference(x, w1, b1, w2, b2, ws=None, bs=None):
    identity = x if ws is None else x @ ws + bs
    out = jnp.tanh(x @ w1 + b1)
    out = out @ w2 + b2
    return jnp.tanh(out + identity)


if __name__ == "__main__":
    key = jax.random.PRNGKey(0)

    # --- case 1: Linear shortcut (n_input != n_output), single grid step ----
    B, n_in, n_out = 8, 16, 32
    kx, k1, k2, k3, key = jax.random.split(key, 5)
    x = jax.random.normal(kx, (B, n_in), jnp.float32)
    w1, b1 = _init_linear(k1, n_in, n_out)
    w2, b2 = _init_linear(k2, n_out, n_out)
    ws, bs = _init_linear(k3, n_in, n_out)   # shortcut (n_input != n_output)

    out = jax.block_until_ready(tanh_resblock(x, w1, b1, w2, b2, ws, bs))
    assert out.shape == (B, n_out)
    assert jnp.allclose(out, _reference(x, w1, b1, w2, b2, ws, bs),
                        atol=1e-5, rtol=1e-5)

    # --- case 2: batch-tiled grid path (4 grid steps of 16 rows) ------------
    B2 = 64
    kx2, key = jax.random.split(key)
    x2 = jax.random.normal(kx2, (B2, n_in), jnp.float32)
    out2 = jax.block_until_ready(
        tanh_resblock(x2, w1, b1, w2, b2, ws, bs, block_b=16))
    assert jnp.allclose(out2, _reference(x2, w1, b1, w2, b2, ws, bs),
                        atol=1e-5, rtol=1e-5)

    # --- case 3: Identity shortcut (n_input == n_output) --------------------
    kx3, k4, k5, key = jax.random.split(key, 4)
    x3 = jax.random.normal(kx3, (B, n_out), jnp.float32)
    w1i, b1i = _init_linear(k4, n_out, n_out)
    w2i, b2i = _init_linear(k5, n_out, n_out)
    out3 = jax.block_until_ready(tanh_resblock(x3, w1i, b1i, w2i, b2i))
    assert jnp.allclose(out3, _reference(x3, w1i, b1i, w2i, b2i),
                        atol=1e-5, rtol=1e-5)

    # --- case 4: identity shortcut, batch-tiled --------------------------
    kx4, key = jax.random.split(key)
    x4 = jax.random.normal(kx4, (B2, n_out), jnp.float32)
    out4 = jax.block_until_ready(
        tanh_resblock(x4, w1i, b1i, w2i, b2i, block_b=16))
    assert jnp.allclose(out4, _reference(x4, w1i, b1i, w2i, b2i),
                        atol=1e-5, rtol=1e-5)

    # --- case 5: bf16 compute path (v6e/v7x MXU throughput) -----------------
    out5 = jax.block_until_ready(
        tanh_resblock(x2, w1, b1, w2, b2, ws, bs, block_b=16,
                      compute_dtype=jnp.bfloat16))
    assert out5.dtype == jnp.float32
    assert jnp.allclose(out5, _reference(x2, w1, b1, w2, b2, ws, bs),
                        atol=1e-1, rtol=0)

    print("KERNEL_OK")
</pallas_src>

<mosaic_0001>
module attributes {stable_mosaic.version = 11 : i64} {
  func.func @_resblock_linear_shortcut_kernel(%arg0: i32, %arg1: memref<8x16xf32, #tpu.memory_space<vmem>>, %arg2: memref<16x64xf32, #tpu.memory_space<vmem>>, %arg3: memref<1x64xf32, #tpu.memory_space<vmem>>, %arg4: memref<32x32xf32, #tpu.memory_space<vmem>>, %arg5: memref<1x32xf32, #tpu.memory_space<vmem>>, %arg6: memref<8x32xf32, #tpu.memory_space<vmem>>) attributes {dimension_semantics = [#tpu.dimension_semantics<parallel>], iteration_bounds = array<i64: 1>, scalar_prefetch = 0 : i64, scratch_operands = 0 : i64, tpu.core_type = #tpu.core_type<tc>, window_params = [{transform_indices = @transform_0, window_bounds = array<i64: 8, 16>}, {pipeline_mode = #tpu.pipeline_mode<synchronous>, transform_indices = @transform_1, window_bounds = array<i64: 16, 64>}, {pipeline_mode = #tpu.pipeline_mode<synchronous>, transform_indices = @transform_2, window_bounds = array<i64: 1, 64>}, {pipeline_mode = #tpu.pipeline_mode<synchronous>, transform_indices = @transform_3, window_bounds = array<i64: 32, 32>}, {pipeline_mode = #tpu.pipeline_mode<synchronous>, transform_indices = @transform_4, window_bounds = array<i64: 1, 32>}, {transform_indices = @transform_5, window_bounds = array<i64: 8, 32>}]} {
    %c0 = arith.constant 0 : index
    %c0_0 = arith.constant 0 : index
    %0 = vector.load %arg1[%c0, %c0_0] : memref<8x16xf32, #tpu.memory_space<vmem>>, vector<8x16xf32>
    %c0_1 = arith.constant 0 : index
    %c0_2 = arith.constant 0 : index
    %1 = vector.load %arg2[%c0_1, %c0_2] : memref<16x64xf32, #tpu.memory_space<vmem>>, vector<16x64xf32>
    %cst = arith.constant dense<0.000000e+00> : vector<8x64xf32>
    %2 = tpu.matmul %0, %1, %cst {dimension_numbers = #tpu.dot_dimension_numbers<[1], [0], [0], [1], [0, 0, 1, 1], [], []>} : vector<8x16xf32>, vector<16x64xf32>, vector<8x64xf32> -> vector<8x64xf32>
    %c0_3 = arith.constant 0 : index
    %c0_4 = arith.constant 0 : index
    %3 = vector.load %arg3[%c0_3, %c0_4] : memref<1x64xf32, #tpu.memory_space<vmem>>, vector<1x64xf32>
    %4 = vector.broadcast %3 : vector<1x64xf32> to vector<8x64xf32>
    %5 = arith.addf %2, %4 : vector<8x64xf32>
    %6 = vector.extract_strided_slice %5 {offsets = [0, 0], sizes = [8, 32], strides = [1, 1]} : vector<8x64xf32> to vector<8x32xf32>
    %7 = math.tanh %6 : vector<8x32xf32>
    %8 = vector.extract_strided_slice %5 {offsets = [0, 32], sizes = [8, 32], strides = [1, 1]} : vector<8x64xf32> to vector<8x32xf32>
    %c0_5 = arith.constant 0 : index
    %c0_6 = arith.constant 0 : index
    %9 = vector.load %arg4[%c0_5, %c0_6] : memref<32x32xf32, #tpu.memory_space<vmem>>, vector<32x32xf32>
    %cst_7 = arith.constant dense<0.000000e+00> : vector<8x32xf32>
    %10 = tpu.matmul %7, %9, %cst_7 {dimension_numbers = #tpu.dot_dimension_numbers<[1], [0], [0], [1], [0, 0, 1, 1], [], []>} : vector<8x32xf32>, vector<32x32xf32>, vector<8x32xf32> -> vector<8x32xf32>
    %c0_8 = arith.constant 0 : index
    %c0_9 = arith.constant 0 : index
    %11 = vector.load %arg5[%c0_8, %c0_9] : memref<1x32xf32, #tpu.memory_space<vmem>>, vector<1x32xf32>
    %12 = vector.broadcast %11 : vector<1x32xf32> to vector<8x32xf32>
    %13 = arith.addf %10, %12 : vector<8x32xf32>
    %14 = arith.addf %13, %8 : vector<8x32xf32>
    %15 = math.tanh %14 : vector<8x32xf32>
    %c0_10 = arith.constant 0 : index
    %c0_11 = arith.constant 0 : index
    %16 = vector.load %arg6[%c0_10, %c0_11] : memref<8x32xf32, #tpu.memory_space<vmem>>, vector<8x32xf32>
    tpu.vector_store %arg6[%c0_10, %c0_11], %15 {strides = array<i32>} : memref<8x32xf32, #tpu.memory_space<vmem>>, vector<8x32xf32>,
    return
  }
  func.func @transform_0(%arg0: i32) -> (i32, i32) {
    %c0_i32 = arith.constant 0 : i32
    %c0_i32_0 = arith.constant 0 : i32
    return %arg0, %c0_i32 : i32, i32
  }
  func.func @transform_1(%arg0: i32) -> (i32, i32) {
    %c0_i32 = arith.constant 0 : i32
    %c0_i32_0 = arith.constant 0 : i32
    %c0_i32_1 = arith.constant 0 : i32
    return %c0_i32, %c0_i32_0 : i32, i32
  }
  func.func @transform_2(%arg0: i32) -> (i32, i32) {
    %c0_i32 = arith.constant 0 : i32
    %c0_i32_0 = arith.constant 0 : i32
    %c0_i32_1 = arith.constant 0 : i32
    return %c0_i32, %c0_i32_0 : i32, i32
  }
  func.func @transform_3(%arg0: i32) -> (i32, i32) {
    %c0_i32 = arith.constant 0 : i32
    %c0_i32_0 = arith.constant 0 : i32
    %c0_i32_1 = arith.constant 0 : i32
    return %c0_i32, %c0_i32_0 : i32, i32
  }
  func.func @transform_4(%arg0: i32) -> (i32, i32) {
    %c0_i32 = arith.constant 0 : i32
    %c0_i32_0 = arith.constant 0 : i32
    %c0_i32_1 = arith.constant 0 : i32
    return %c0_i32, %c0_i32_0 : i32, i32
  }
  func.func @transform_5(%arg0: i32) -> (i32, i32) {
    %c0_i32 = arith.constant 0 : i32
    %c0_i32_0 = arith.constant 0 : i32
    return %arg0, %c0_i32 : i32, i32
  }
}

</mosaic_0001>

<llo_original>
// kernel: tpu_custom_call.1
$region0: #{tpu_custom_call.1}
  #allocation0 [shape = 'u32[]', space=smem, size = 0x4, offset = 0x4, fixed_abs, tag = 'smem constant byte address 0x4 - core index']
  #allocation1 [shape = 'u32[144,128]{1,0:T(1,128)}', space=vmem, size = 0x12000, scoped, tag = 'internal scratch']
  %s0 = inlined_call_operand.hbm [shape: f32[8,16], index: 0, kind: input, shape index: {}]
  %s1 = inlined_call_operand.hbm [shape: f32[16,64], index: 1, kind: input, shape index: {}]
  %s2 = inlined_call_operand.vmem [shape: f32[1,64], index: 2, kind: input, shape index: {}]
  %s3 = inlined_call_operand.hbm [shape: f32[32,32], index: 3, kind: input, shape index: {}]
  %s4 = inlined_call_operand.vmem [shape: f32[1,32], index: 4, kind: input, shape index: {}]
  %s5 = inlined_call_operand.hbm [shape: f32[8,32], index: 5, kind: output, shape index: {}]
  %s6 = sld [smem:[#allocation0]]
  $region42: #{tpu_custom_call.1} parent=0
    _
  %s8 = ssub.s32 1, %s6
  %s9 = scalar_select 0, %s8, %s6
  $region1: #{tpu_custom_call.1} parent=0
    #allocation2 [shape = 'u8[4096]{0}', space=vmem, size = 0x1000, scoped, tag = 'input window, operand 0, single buffered']
    #allocation3 [shape = 's32[1]{0}', space=sflag, size = 0x4, scoped, tag = 'scoped memory for tpu_custom_call.1']
    #allocation4 [shape = 's32[1]{0}', space=sflag, size = 0x4, scoped, tag = 'scoped memory for tpu_custom_call.1']
    #allocation5 [shape = 'u8[8192]{0}', space=vmem, size = 0x2000, scoped, tag = 'input window, operand 1, single buffered']
    #allocation6 [shape = 's32[1]{0}', space=sflag, size = 0x4, scoped, tag = 'scoped memory for tpu_custom_call.1']
    #allocation7 [shape = 'u8[16384]{0}', space=vmem, size = 0x4000, scoped, tag = 'input window, operand 3, single buffered']
    #allocation8 [shape = 'u8[4096]{0}', space=vmem, size = 0x1000, scoped, tag = 'output window, operand 0, single buffered']
    %10 = vsyncpa [#allocation3], 0
    %11 = vsyncpa [#allocation6], 0
    %12 = vsyncpa [#allocation4], 0
    // Predicated region
    $region2: #{tpu_custom_call.1} parent=1 // pred_check
      _
    $region3: #{tpu_custom_call.1} parent=1 // pred_check_branch
      %14 = sbr.rel (0) target = $region5
    $region4: #{tpu_custom_call.1} parent=1 // pred_region
      %s16 = ssub.s32 128, 128
      %17 = vsyncadd [#allocation3], %s16
      %s19 = sshll.u32 [#allocation2], 4
      %s20 = int_to_ptr.vmem [resolvable:$true] %s19
      %22 = dma.hbm_to_vmem [thread:$0]  %s0, 128, %s20, [#allocation3]
    $region5: #{tpu_custom_call.1} parent=1 // pred_fallthru
      _
    // Predicated region
    $region6: #{tpu_custom_call.1} parent=1 // pred_check
      _
    $region7: #{tpu_custom_call.1} parent=1 // pred_check_branch
      %24 = sbr.rel (0) target = $region9
    $region8: #{tpu_custom_call.1} parent=1 // pred_region
      %s26 = ssub.s32 256, 256
      %27 = vsyncadd [#allocation6], %s26
      %s28 = sshll.u32 [#allocation5], 4
      %s29 = int_to_ptr.vmem [resolvable:$true] %s28
      %34 = dma.hbm_to_vmem [thread:$0]  %s1, 256, %s29, [#allocation6], 128, 128, 8
    $region9: #{tpu_custom_call.1} parent=1 // pred_fallthru
      _
    // Predicated region
    $region10: #{tpu_custom_call.1} parent=1 // pred_check
      _
    $region11: #{tpu_custom_call.1} parent=1 // pred_check_branch
      %36 = sbr.rel (0) target = $region13
    $region12: #{tpu_custom_call.1} parent=1 // pred_region
      _
    $region13: #{tpu_custom_call.1} parent=1 // pred_fallthru
      _
    // Predicated region
    $region14: #{tpu_custom_call.1} parent=1 // pred_check
      _
    $region15: #{tpu_custom_call.1} parent=1 // pred_check_branch
      %38 = sbr.rel (0) target = $region17
    $region16: #{tpu_custom_call.1} parent=1 // pred_region
      %s40 = ssub.s32 512, 512
      %41 = vsyncadd [#allocation6], %s40
      %s42 = sshll.u32 [#allocation7], 4
      %s43 = int_to_ptr.vmem [resolvable:$true] %s42
      %48 = dma.hbm_to_vmem [thread:$0]  %s3, 512, %s43, [#allocation6], 128, 128, 8
    $region17: #{tpu_custom_call.1} parent=1 // pred_fallthru
      _
    // Predicated region
    $region18: #{tpu_custom_call.1} parent=1 // pred_check
      _
    $region19: #{tpu_custom_call.1} parent=1 // pred_check_branch
      %50 = sbr.rel (0) target = $region21
    $region20: #{tpu_custom_call.1} parent=1 // pred_region
      _
    $region21: #{tpu_custom_call.1} parent=1 // pred_fallthru
      _
    // Predicated region
    $region22: #{tpu_custom_call.1} parent=1 // pred_check
      _
    $region23: #{tpu_custom_call.1} parent=1 // pred_check_branch
      %52 = sbr.rel (0) target = $region25
    $region24: #{tpu_custom_call.1} parent=1 // pred_region
      %53 = dma.done [#allocation3], 128
    $region25: #{tpu_custom_call.1} parent=1 // pred_fallthru
      _
    // Predicated region
    $region26: #{tpu_custom_call.1} parent=1 // pred_check
      _
    $region27: #{tpu_custom_call.1} parent=1 // pred_check_branch
      %55 = sbr.rel (0) target = $region29
    $region28: #{tpu_custom_call.1} parent=1 // pred_region
      %56 = dma.done [#allocation6], 256
    $region29: #{tpu_custom_call.1} parent=1 // pred_fallthru
      _
    // Predicated region
    $region30: #{tpu_custom_call.1} parent=1 // pred_check
      _
    $region31: #{tpu_custom_call.1} parent=1 // pred_check_branch
      %58 = sbr.rel (0) target = $region33
    $region32: #{tpu_custom_call.1} parent=1 // pred_region
      %59 = dma.done [#allocation6], 512
    $region33: #{tpu_custom_call.1} parent=1 // pred_fallthru
      _
    %v60 = vld [vmem:[#allocation2] sm:$0xff]
    %v61 = vld [vmem:[#allocation5] sm:$0xff]
    %v62 = vld [vmem:[#allocation5 + $0x8] sm:$0xff]
    %v63 = vld [vmem:[%s2] sm:$0x1]
    %v65 = vlaneseq
    %v66 = vshrl.u32 %v65, 7
    %v67 = vsub.s32 0, %v66
    %v68 = vrot.slane %v63, %v67
    %vm70 = vcmask 130048
    %v72 = vsel %vm70, %v60, 0
    %74 = vmatprep.subr.mxu0 0.0
    %75 = vmatpush1.msra.mxu0 %v61
    %76 = vmatprep.subr.mxu0 0.0
    %77 = vmatpush1.msra.mxu0 %v62
    %78 = vmatprep.subr.mxu0 0.0
    %79 = vmatpush1.msra.mxu0 0.0
    %80 = vmatprep.subr.mxu0 0.0
    %81 = vmatpush1.msra.mxu0 0.0
    %82 = vmatprep.subr.mxu0 0.0
    %83 = vmatpush1.msra.mxu0 0.0
    %84 = vmatprep.subr.mxu0 0.0
    %85 = vmatpush1.msra.mxu0 0.0
    %86 = vmatprep.subr.mxu0 0.0
    %87 = vmatpush1.msra.mxu0 0.0
    %88 = vmatprep.subr.mxu0 0.0
    %89 = vmatpush1.msra.mxu0 0.0
    %90 = vmatprep.subr.mxu0 0.0
    %91 = vmatpush1.msra.mxu0 0.0
    %92 = vmatprep.subr.mxu0 0.0
    %93 = vmatpush1.msra.mxu0 0.0
    %94 = vmatprep.subr.mxu0 0.0
    %95 = vmatpush1.msra.mxu0 0.0
    %96 = vmatprep.subr.mxu0 0.0
    %97 = vmatpush1.msra.mxu0 0.0
    %98 = vmatprep.subr.mxu0 0.0
    %99 = vmatpush1.msra.mxu0 0.0
    %100 = vmatprep.subr.mxu0 0.0
    %101 = vmatpush1.msra.mxu0 0.0
    %102 = vmatprep.subr.mxu0 0.0
    %103 = vmatpush1.msra.mxu0 0.0
    %104 = vmatprep.subr.mxu0 0.0
    %105 = vmatpush1.msra.mxu0 0.0
    %106 = vmatprep.subr.mxu0 0.0
    %107 = vmatpush1.msra.mxu0 0.0
    %108 = vmatprep.subr.mxu0 0.0
    %109 = vmatpush1.msra.mxu0 0.0
    %110 = vmatprep.subr.mxu0 0.0
    %111 = vmatpush1.msra.mxu0 0.0
    %112 = vmatprep.subr.mxu0 0.0
    %113 = vmatpush1.msra.mxu0 0.0
    %114 = vmatprep.subr.mxu0 0.0
    %115 = vmatpush1.msra.mxu0 0.0
    %116 = vmatprep.subr.mxu0 0.0
    %117 = vmatpush1.msra.mxu0 0.0
    %118 = vmatprep.subr.mxu0 0.0
    %119 = vmatpush1.msra.mxu0 0.0
    %120 = vmatprep.subr.mxu0 0.0
    %121 = vmatpush1.msra.mxu0 0.0
    %122 = vmatprep.subr.mxu0 0.0
    %123 = vmatpush1.msra.mxu0 0.0
    %124 = vmatprep.subr.mxu0 0.0
    %125 = vmatpush1.msra.mxu0 0.0
    %126 = vmatprep.subr.mxu0 0.0
    %127 = vmatpush1.msra.mxu0 0.0
    %128 = vmatprep.subr.mxu0 0.0
    %129 = vmatpush1.msra.mxu0 0.0
    %130 = vmatprep.subr.mxu0 0.0
    %131 = vmatpush1.msra.mxu0 0.0
    %132 = vmatprep.subr.mxu0 0.0
    %133 = vmatpush1.msra.mxu0 0.0
    %134 = vmatprep.subr.mxu0 0.0
    %135 = vmatpush1.msra.mxu0 0.0
    %136 = vmatprep.subr.mxu0 0.0
    %137 = vmatpush1.msra.mxu0 0.0
    %138 = vmatprep.mubr.f32.mxu0 0.0
    %139 = vmatmul.mubr.f32.gmra.mrb[0].mxu0 %v72
    %v140 = vpop.f32.mrb[0].mxu0
    %v141 = vadd.f32 %v68, %v140
    %v142 = vpop.f32.mrb[0].mxu0
    %143 = vdwg.mxu0
    %v144 = vtanh.pop %v141
    %v145 = vld [vmem:[#allocation7] sm:$0xff]
    %v146 = vld [vmem:[#allocation7 + $0x8] sm:$0xff]
    %v147 = vld [vmem:[#allocation7 + $0x10] sm:$0xff]
    %v148 = vld [vmem:[#allocation7 + $0x18] sm:$0xff]
    %v149 = vld [vmem:[%s4] sm:$0x1]
    %v151 = vlaneseq
    %v152 = vshrl.u32 %v151, 7
    %v153 = vsub.s32 0, %v152
    %v154 = vrot.slane %v149, %v153
    %vm156 = vcmask 261120
    %v158 = vsel %vm156, %v144, 0
    %160 = vmatprep.subr.mxu0 0.0
    %161 = vmatpush1.msra.mxu0 %v145
    %162 = vmatprep.subr.mxu0 0.0
    %163 = vmatpush1.msra.mxu0 %v146
    %164 = vmatprep.subr.mxu0 0.0
    %165 = vmatpush1.msra.mxu0 %v147
    %166 = vmatprep.subr.mxu0 0.0
    %167 = vmatpush1.msra.mxu0 %v148
    %168 = vmatprep.subr.mxu0 0.0
    %169 = vmatpush1.msra.mxu0 0.0
    %170 = vmatprep.subr.mxu0 0.0
    %171 = vmatpush1.msra.mxu0 0.0
    %172 = vmatprep.subr.mxu0 0.0
    %173 = vmatpush1.msra.mxu0 0.0
    %174 = vmatprep.subr.mxu0 0.0
    %175 = vmatpush1.msra.mxu0 0.0
    %176 = vmatprep.subr.mxu0 0.0
    %177 = vmatpush1.msra.mxu0 0.0
    %178 = vmatprep.subr.mxu0 0.0
    %179 = vmatpush1.msra.mxu0 0.0
    %180 = vmatprep.subr.mxu0 0.0
    %181 = vmatpush1.msra.mxu0 0.0
    %182 = vmatprep.subr.mxu0 0.0
    %183 = vmatpush1.msra.mxu0 0.0
    %184 = vmatprep.subr.mxu0 0.0
    %185 = vmatpush1.msra.mxu0 0.0
    %186 = vmatprep.subr.mxu0 0.0
    %187 = vmatpush1.msra.mxu0 0.0
    %188 = vmatprep.subr.mxu0 0.0
    %189 = vmatpush1.msra.mxu0 0.0
    %190 = vmatprep.subr.mxu0 0.0
    %191 = vmatpush1.msra.mxu0 0.0
    %192 = vmatprep.subr.mxu0 0.0
    %193 = vmatpush1.msra.mxu0 0.0
    %194 = vmatprep.subr.mxu0 0.0
    %195 = vmatpush1.msra.mxu0 0.0
    %196 = vmatprep.subr.mxu0 0.0
    %197 = vmatpush1.msra.mxu0 0.0
    %198 = vmatprep.subr.mxu0 0.0
    %199 = vmatpush1.msra.mxu0 0.0
    %200 = vmatprep.subr.mxu0 0.0
    %201 = vmatpush1.msra.mxu0 0.0
    %202 = vmatprep.subr.mxu0 0.0
    %203 = vmatpush1.msra.mxu0 0.0
    %204 = vmatprep.subr.mxu0 0.0
    %205 = vmatpush1.msra.mxu0 0.0
    %206 = vmatprep.subr.mxu0 0.0
    %207 = vmatpush1.msra.mxu0 0.0
    %208 = vmatprep.subr.mxu0 0.0
    %209 = vmatpush1.msra.mxu0 0.0
    %210 = vmatprep.subr.mxu0 0.0
    %211 = vmatpush1.msra.mxu0 0.0
    %212 = vmatprep.subr.mxu0 0.0
    %213 = vmatpush1.msra.mxu0 0.0
    %214 = vmatprep.subr.mxu0 0.0
    %215 = vmatpush1.msra.mxu0 0.0
    %216 = vmatprep.subr.mxu0 0.0
    %217 = vmatpush1.msra.mxu0 0.0
    %218 = vmatprep.subr.mxu0 0.0
    %219 = vmatpush1.msra.mxu0 0.0
    %220 = vmatprep.subr.mxu0 0.0
    %221 = vmatpush1.msra.mxu0 0.0
    %222 = vmatprep.subr.mxu0 0.0
    %223 = vmatpush1.msra.mxu0 0.0
    %224 = vmatprep.mubr.f32.mxu0 0.0
    %225 = vmatmul.mubr.f32.gmra.mrb[0].mxu0 %v158
    %v226 = vpop.f32.mrb[0].mxu0
    %v227 = vadd.f32 %v154, %v226
    %v228 = vpop.f32.mrb[0].mxu0
    %229 = vdwg.mxu0
    %231 = vrot.lane.b32.xlu0 %v141, 96
    %v232 = vpop.permute.xlu0 %231
    %v234 = vadd.f32 %v227, %v232
    %v235 = vtanh.pop %v234
    %236 = vst.msk [vmem:[#allocation8] sm:$0xff] %vm156, %v235
    // Predicated region
    $region34: #{tpu_custom_call.1} parent=1 // pred_check
      _
    $region35: #{tpu_custom_call.1} parent=1 // pred_check_branch
      %238 = sbr.rel (0) target = $region37
    $region36: #{tpu_custom_call.1} parent=1 // pred_region
      %s240 = ssub.s32 128, 128
      %241 = vsyncadd [#allocation4], %s240
      %s243 = sshll.u32 [#allocation8], 4
      %s244 = int_to_ptr.vmem [resolvable:$true] %s243
      %246 = dma.vmem_to_hbm [thread:$0]  %s244, 128, %s5, [#allocation4]
    $region37: #{tpu_custom_call.1} parent=1 // pred_fallthru
      _
    // Predicated region
    $region38: #{tpu_custom_call.1} parent=1 // pred_check
      _
    $region39: #{tpu_custom_call.1} parent=1 // pred_check_branch
      %248 = sbr.rel (0) target = $region41
    $region40: #{tpu_custom_call.1} parent=1 // pred_region
      %249 = dma.done [#allocation4], 128
    $region41: #{tpu_custom_call.1} parent=1 // pred_fallthru
      _
    %250 = vsyncpa [#allocation3], 1
    %251 = vsyncpa [#allocation6], 1
    %252 = vsyncpa [#allocation4], 1

</llo_original>
